<compile_context>
chip_gen: v6e
topology: v6e:2x2x1
jax: 0.10.0
libtpu: 0.0.40
codegen_flags: <defaults>
</compile_context>

<pallas_src>
import jax
import jax.numpy as jnp
from jax.experimental import pallas as pl
from jax.experimental.pallas import tpu as pltpu

IN_DIM = 784
HID_DIM = 128
OUT_DIM = 62
MAX_TM = 1024   # batch tile cap; fits default scoped VMEM on v5e/v6e/v7x


def _round_up(n, m):
    return ((n + m - 1) // m) * m


def mlp_kernel(x_ref, w1_ref, b1_ref, w2_ref, b2_ref, o_ref):
    # fc1 + ReLU: MXU matmul with f32 accumulation, VPU bias + max.
    h = jnp.dot(x_ref[...], w1_ref[...], preferred_element_type=jnp.float32)
    h = jnp.maximum(h + b1_ref[...], 0.0)
    # fc2; the "- 0.5" is pre-folded into b2_ref (exact).
    y = jnp.dot(h.astype(w2_ref.dtype), w2_ref[...],
                preferred_element_type=jnp.float32)
    o_ref[...] = (y + b2_ref[...]).astype(o_ref.dtype)


def prepare_params(w1, b1, w2, b2, compute_dtype=jnp.float32):
    """One-time (hoisted) parameter preprocessing.

    w1: (784, 128), b1: (128,), w2: (128, 62), b2: (62,)  [x @ W + b layout]
    Returns kernel-ready params; the "-0.5" of the forward is folded into b2.
    Pass compute_dtype=jnp.bfloat16 for the bf16 MXU path (v5e/v6e win,
    ~1e-2 relative accuracy delta vs f32).
    """
    w1_k = w1.astype(compute_dtype)
    b1_k = b1.astype(jnp.float32).reshape(1, HID_DIM)
    w2_k = w2.astype(compute_dtype)
    b2_k = b2.astype(jnp.float32).reshape(1, OUT_DIM) - 0.5
    return w1_k, b1_k, w2_k, b2_k


def model_forward(x, w1_k, b1_k, w2_k, b2_k):
    """x: any shape with 784 trailing elements per row (like x.view(-1, 784)).
    Returns (B, 62) float32."""
    x2d = x.reshape(-1, IN_DIM).astype(w1_k.dtype)
    B = x2d.shape[0]

    # Batch tile: multiple of 8 (f32 sublane), capped; grid clips the edge.
    tm = min(MAX_TM, _round_up(B, 8))
    grid_m = pl.cdiv(B, tm)

    flops = 2 * B * (IN_DIM * HID_DIM + HID_DIM * OUT_DIM)
    bytes_accessed = (
        B * IN_DIM * x2d.dtype.itemsize          # x read
        + IN_DIM * HID_DIM * w1_k.dtype.itemsize  # w1
        + HID_DIM * OUT_DIM * w2_k.dtype.itemsize  # w2
        + (HID_DIM + OUT_DIM) * 4                 # biases
        + B * OUT_DIM * 4)                        # output write

    out = pl.pallas_call(
        mlp_kernel,
        out_shape=jax.ShapeDtypeStruct((B, OUT_DIM), jnp.float32),
        grid=(grid_m,),
        in_specs=[
            pl.BlockSpec((tm, IN_DIM), lambda i: (i, 0)),          # x tile
            pl.BlockSpec((IN_DIM, HID_DIM), lambda i: (0, 0)),     # w1 (resident)
            pl.BlockSpec((1, HID_DIM), lambda i: (0, 0)),          # b1 (resident)
            pl.BlockSpec((HID_DIM, OUT_DIM), lambda i: (0, 0)),    # w2 (resident)
            pl.BlockSpec((1, OUT_DIM), lambda i: (0, 0)),          # b2-0.5 (resident)
        ],
        out_specs=pl.BlockSpec((tm, OUT_DIM), lambda i: (i, 0)),
        compiler_params=pltpu.CompilerParams(
            dimension_semantics=("parallel",),
        ),
        cost_estimate=pl.CostEstimate(
            flops=flops, transcendentals=0, bytes_accessed=bytes_accessed),
    )(x2d, w1_k, b1_k, w2_k, b2_k)
    return out


def make_params(key):
    k1, k2, k3, k4 = jax.random.split(key, 4)
    # PyTorch-default-like uniform init; weights stored as (in, out) so the
    # kernel computes x @ W + b (== x @ W.T + b for PyTorch's (out, in) W).
    bound1 = 1.0 / (IN_DIM ** 0.5)
    bound2 = 1.0 / (HID_DIM ** 0.5)
    w1 = jax.random.uniform(k1, (IN_DIM, HID_DIM), jnp.float32, -bound1, bound1)
    b1 = jax.random.uniform(k2, (HID_DIM,), jnp.float32, -bound1, bound1)
    w2 = jax.random.uniform(k3, (HID_DIM, OUT_DIM), jnp.float32, -bound2, bound2)
    b2 = jax.random.uniform(k4, (OUT_DIM,), jnp.float32, -bound2, bound2)
    return w1, b1, w2, b2


if __name__ == "__main__":
    key = jax.random.PRNGKey(0)
    kx, kp = jax.random.split(key)

    # Small MNIST-like batch: (B, 1, 28, 28) -> view(-1, 784)
    x = jax.random.normal(kx, (4, 1, 28, 28), jnp.float32)
    w1, b1, w2, b2 = make_params(kp)

    # Hoisted, one-time param prep (f32 compute path -> exact PyTorch match).
    params = prepare_params(w1, b1, w2, b2)

    fwd = jax.jit(model_forward)
    out = fwd(x, *params)
    out = jax.block_until_ready(out)

    # Pure-JAX reference matching the PyTorch forward exactly.
    x2d = x.reshape(-1, IN_DIM)
    ref = jnp.maximum(x2d @ w1 + b1[None, :], 0.0) @ w2 + b2[None, :] - 0.5
    assert out.shape == (4, OUT_DIM)
    assert jnp.allclose(out, ref, atol=1e-4, rtol=1e-4)

    print("KERNEL_OK")
</pallas_src>

<mosaic_0001>
module attributes {stable_mosaic.version = 11 : i64} {
  func.func @mlp_kernel(%arg0: i32, %arg1: memref<8x784xf32, #tpu.memory_space<vmem>>, %arg2: memref<784x128xf32, #tpu.memory_space<vmem>>, %arg3: memref<1x128xf32, #tpu.memory_space<vmem>>, %arg4: memref<128x62xf32, #tpu.memory_space<vmem>>, %arg5: memref<1x62xf32, #tpu.memory_space<vmem>>, %arg6: memref<8x62xf32, #tpu.memory_space<vmem>>) attributes {dimension_semantics = [#tpu.dimension_semantics<parallel>], iteration_bounds = array<i64: 1>, scalar_prefetch = 0 : i64, scratch_operands = 0 : i64, tpu.core_type = #tpu.core_type<tc>, window_params = [{transform_indices = @transform_0, window_bounds = array<i64: 8, 784>}, {pipeline_mode = #tpu.pipeline_mode<synchronous>, transform_indices = @transform_1, window_bounds = array<i64: 784, 128>}, {pipeline_mode = #tpu.pipeline_mode<synchronous>, transform_indices = @transform_2, window_bounds = array<i64: 1, 128>}, {pipeline_mode = #tpu.pipeline_mode<synchronous>, transform_indices = @transform_3, window_bounds = array<i64: 128, 62>}, {pipeline_mode = #tpu.pipeline_mode<synchronous>, transform_indices = @transform_4, window_bounds = array<i64: 1, 62>}, {transform_indices = @transform_5, window_bounds = array<i64: 8, 62>}]} {
    %c0 = arith.constant 0 : index
    %c0_0 = arith.constant 0 : index
    %0 = vector.load %arg1[%c0, %c0_0] : memref<8x784xf32, #tpu.memory_space<vmem>>, vector<8x784xf32>
    %c0_1 = arith.constant 0 : index
    %c0_2 = arith.constant 0 : index
    %1 = vector.load %arg2[%c0_1, %c0_2] : memref<784x128xf32, #tpu.memory_space<vmem>>, vector<784x128xf32>
    %cst = arith.constant dense<0.000000e+00> : vector<8x128xf32>
    %2 = tpu.matmul %0, %1, %cst {dimension_numbers = #tpu.dot_dimension_numbers<[1], [0], [0], [1], [0, 0, 1, 1], [], []>} : vector<8x784xf32>, vector<784x128xf32>, vector<8x128xf32> -> vector<8x128xf32>
    %c0_3 = arith.constant 0 : index
    %c0_4 = arith.constant 0 : index
    %3 = vector.load %arg3[%c0_3, %c0_4] : memref<1x128xf32, #tpu.memory_space<vmem>>, vector<1x128xf32>
    %4 = vector.broadcast %3 : vector<1x128xf32> to vector<8x128xf32>
    %5 = arith.addf %2, %4 : vector<8x128xf32>
    %cst_5 = arith.constant 0.000000e+00 : f32
    %6 = vector.broadcast %cst_5 : f32 to vector<8x128xf32>
    %7 = arith.maximumf %5, %6 : vector<8x128xf32>
    %c0_6 = arith.constant 0 : index
    %c0_7 = arith.constant 0 : index
    %8 = vector.load %arg4[%c0_6, %c0_7] : memref<128x62xf32, #tpu.memory_space<vmem>>, vector<128x62xf32>
    %cst_8 = arith.constant dense<0.000000e+00> : vector<8x62xf32>
    %9 = tpu.matmul %7, %8, %cst_8 {dimension_numbers = #tpu.dot_dimension_numbers<[1], [0], [0], [1], [0, 0, 1, 1], [], []>} : vector<8x128xf32>, vector<128x62xf32>, vector<8x62xf32> -> vector<8x62xf32>
    %c0_9 = arith.constant 0 : index
    %c0_10 = arith.constant 0 : index
    %10 = vector.load %arg5[%c0_9, %c0_10] : memref<1x62xf32, #tpu.memory_space<vmem>>, vector<1x62xf32>
    %11 = vector.broadcast %10 : vector<1x62xf32> to vector<8x62xf32>
    %12 = arith.addf %9, %11 : vector<8x62xf32>
    %c0_11 = arith.constant 0 : index
    %c0_12 = arith.constant 0 : index
    %13 = vector.load %arg6[%c0_11, %c0_12] : memref<8x62xf32, #tpu.memory_space<vmem>>, vector<8x62xf32>
    tpu.vector_store %arg6[%c0_11, %c0_12], %12 {strides = array<i32>} : memref<8x62xf32, #tpu.memory_space<vmem>>, vector<8x62xf32>,
    return
  }
  func.func @transform_0(%arg0: i32) -> (i32, i32) {
    %c0_i32 = arith.constant 0 : i32
    %c0_i32_0 = arith.constant 0 : i32
    return %arg0, %c0_i32 : i32, i32
  }
  func.func @transform_1(%arg0: i32) -> (i32, i32) {
    %c0_i32 = arith.constant 0 : i32
    %c0_i32_0 = arith.constant 0 : i32
    %c0_i32_1 = arith.constant 0 : i32
    return %c0_i32, %c0_i32_0 : i32, i32
  }
  func.func @transform_2(%arg0: i32) -> (i32, i32) {
    %c0_i32 = arith.constant 0 : i32
    %c0_i32_0 = arith.constant 0 : i32
    %c0_i32_1 = arith.constant 0 : i32
    return %c0_i32, %c0_i32_0 : i32, i32
  }
  func.func @transform_3(%arg0: i32) -> (i32, i32) {
    %c0_i32 = arith.constant 0 : i32
    %c0_i32_0 = arith.constant 0 : i32
    %c0_i32_1 = arith.constant 0 : i32
    return %c0_i32, %c0_i32_0 : i32, i32
  }
  func.func @transform_4(%arg0: i32) -> (i32, i32) {
    %c0_i32 = arith.constant 0 : i32
    %c0_i32_0 = arith.constant 0 : i32
    %c0_i32_1 = arith.constant 0 : i32
    return %c0_i32, %c0_i32_0 : i32, i32
  }
  func.func @transform_5(%arg0: i32) -> (i32, i32) {
    %c0_i32 = arith.constant 0 : i32
    %c0_i32_0 = arith.constant 0 : i32
    return %arg0, %c0_i32 : i32, i32
  }
}

</mosaic_0001>

<llo_original>
// kernel: model_forward.1
$region0: #{model_forward.1}
  #allocation0 [shape = 'u32[]', space=smem, size = 0x4, offset = 0x4, fixed_abs, tag = 'smem constant byte address 0x4 - core index']
  #allocation1 [shape = 'u32[144,128]{1,0:T(1,128)}', space=vmem, size = 0x12000, scoped, tag = 'internal scratch']
  %s0 = inlined_call_operand.vmem [shape: f32[4,784], index: 0, kind: input, shape index: {}]
  %s1 = inlined_call_operand.hbm [shape: f32[784,128], index: 1, kind: input, shape index: {}]
  %s2 = inlined_call_operand.vmem [shape: f32[1,128], index: 2, kind: input, shape index: {}]
  %s3 = inlined_call_operand.vmem [shape: f32[128,62], index: 3, kind: input, shape index: {}]
  %s4 = inlined_call_operand.vmem [shape: f32[1,62], index: 4, kind: input, shape index: {}]
  %s5 = inlined_call_operand.hbm [shape: f32[4,62], index: 5, kind: output, shape index: {}]
  %s6 = sld [smem:[#allocation0]]
  $region34: #{model_forward.1} parent=0
    _
  %s8 = ssub.s32 1, %s6
  %s9 = scalar_select 0, %s8, %s6
  $region1: #{model_forward.1} parent=0
    #allocation2 [shape = 'u8[401408]{0}', space=vmem, size = 0x62000, scoped, tag = 'input window, operand 1, single buffered']
    #allocation3 [shape = 's32[1]{0}', space=sflag, size = 0x4, scoped, tag = 'scoped memory for model_forward.1']
    #allocation4 [shape = 's32[1]{0}', space=sflag, size = 0x4, scoped, tag = 'scoped memory for model_forward.1']
    #allocation5 [shape = 'u8[4096]{0}', space=vmem, size = 0x1000, scoped, tag = 'output window, operand 0, single buffered']
    %10 = vsyncpa [#allocation3], 0
    %11 = vsyncpa [#allocation4], 0
    // Predicated region
    $region2: #{model_forward.1} parent=1 // pred_check
      _
    $region3: #{model_forward.1} parent=1 // pred_check_branch
      %13 = sbr.rel (0) target = $region5
    $region4: #{model_forward.1} parent=1 // pred_region
      _
    $region5: #{model_forward.1} parent=1 // pred_fallthru
      _
    // Predicated region
    $region6: #{model_forward.1} parent=1 // pred_check
      _
    $region7: #{model_forward.1} parent=1 // pred_check_branch
      %15 = sbr.rel (0) target = $region9
    $region8: #{model_forward.1} parent=1 // pred_region
      %s17 = ssub.s32 12544, 12544
      %18 = vsyncadd [#allocation3], %s17
      %s19 = sshll.u32 [#allocation2], 4
      %s20 = int_to_ptr.vmem [resolvable:$true] %s19
      %25 = dma.hbm_to_vmem [thread:$0]  %s1, 12544, %s20, [#allocation3], 128, 128, 8
    $region9: #{model_forward.1} parent=1 // pred_fallthru
      _
    // Predicated region
    $region10: #{model_forward.1} parent=1 // pred_check
      _
    $region11: #{model_forward.1} parent=1 // pred_check_branch
      %27 = sbr.rel (0) target = $region13
    $region12: #{model_forward.1} parent=1 // pred_region
      _
    $region13: #{model_forward.1} parent=1 // pred_fallthru
      _
    // Predicated region
    $region14: #{model_forward.1} parent=1 // pred_check
      _
    $region15: #{model_forward.1} parent=1 // pred_check_branch
      %29 = sbr.rel (0) target = $region17
    $region16: #{model_forward.1} parent=1 // pred_region
      _
    $region17: #{model_forward.1} parent=1 // pred_fallthru
      _
    // Predicated region
    $region18: #{model_forward.1} parent=1 // pred_check
      _
    $region19: #{model_forward.1} parent=1 // pred_check_branch
      %31 = sbr.rel (0) target = $region21
    $region20: #{model_forward.1} parent=1 // pred_region
      _
    $region21: #{model_forward.1} parent=1 // pred_fallthru
      _
    // Predicated region
    $region22: #{model_forward.1} parent=1 // pred_check
      _
    $region23: #{model_forward.1} parent=1 // pred_check_branch
      %33 = sbr.rel (0) target = $region25
    $region24: #{model_forward.1} parent=1 // pred_region
      %34 = dma.done [#allocation3], 12544
    $region25: #{model_forward.1} parent=1 // pred_fallthru
      _
    %v35 = vld [vmem:[%s0] sm:$0xff]
    %v36 = vld [vmem:[%s0 + $0x8] sm:$0xff]
    %v37 = vld [vmem:[%s0 + $0x10] sm:$0xff]
    %v38 = vld [vmem:[%s0 + $0x18] sm:$0xf]
    %v39 = vld [vmem:[%s0 + $0x1c] sm:$0xff]
    %v40 = vld [vmem:[%s0 + $0x24] sm:$0xff]
    %v41 = vld [vmem:[%s0 + $0x2c] sm:$0xff]
    %v42 = vld [vmem:[%s0 + $0x34] sm:$0xf]
    %v43 = vld [vmem:[#allocation2] sm:$0xff]
    %v44 = vld [vmem:[#allocation2 + $0x8] sm:$0xff]
    %v45 = vld [vmem:[#allocation2 + $0x10] sm:$0xff]
    %v46 = vld [vmem:[#allocation2 + $0x18] sm:$0xff]
    %v47 = vld [vmem:[#allocation2 + $0x20] sm:$0xff]
    %v48 = vld [vmem:[#allocation2 + $0x28] sm:$0xff]
    %v49 = vld [vmem:[#allocation2 + $0x30] sm:$0xff]
    %v50 = vld [vmem:[#allocation2 + $0x38] sm:$0xff]
    %v51 = vld [vmem:[#allocation2 + $0x40] sm:$0xff]
    %v52 = vld [vmem:[#allocation2 + $0x48] sm:$0xff]
    %v53 = vld [vmem:[#allocation2 + $0x50] sm:$0xff]
    %v54 = vld [vmem:[#allocation2 + $0x58] sm:$0xff]
    %v55 = vld [vmem:[#allocation2 + $0x60] sm:$0xff]
    %v56 = vld [vmem:[#allocation2 + $0x68] sm:$0xff]
    %v57 = vld [vmem:[#allocation2 + $0x70] sm:$0xff]
    %v58 = vld [vmem:[#allocation2 + $0x78] sm:$0xff]
    %v59 = vld [vmem:[#allocation2 + $0x80] sm:$0xff]
    %v60 = vld [vmem:[#allocation2 + $0x88] sm:$0xff]
    %v61 = vld [vmem:[#allocation2 + $0x90] sm:$0xff]
    %v62 = vld [vmem:[#allocation2 + $0x98] sm:$0xff]
    %v63 = vld [vmem:[#allocation2 + $0xa0] sm:$0xff]
    %v64 = vld [vmem:[#allocation2 + $0xa8] sm:$0xff]
    %v65 = vld [vmem:[#allocation2 + $0xb0] sm:$0xff]
    %v66 = vld [vmem:[#allocation2 + $0xb8] sm:$0xff]
    %v67 = vld [vmem:[#allocation2 + $0xc0] sm:$0xff]
    %v68 = vld [vmem:[#allocation2 + $0xc8] sm:$0xff]
    %v69 = vld [vmem:[#allocation2 + $0xd0] sm:$0xff]
    %v70 = vld [vmem:[#allocation2 + $0xd8] sm:$0xff]
    %v71 = vld [vmem:[#allocation2 + $0xe0] sm:$0xff]
    %v72 = vld [vmem:[#allocation2 + $0xe8] sm:$0xff]
    %v73 = vld [vmem:[#allocation2 + $0xf0] sm:$0xff]
    %v74 = vld [vmem:[#allocation2 + $0xf8] sm:$0xff]
    %v75 = vld [vmem:[#allocation2 + $0x100] sm:$0xff]
    %v76 = vld [vmem:[#allocation2 + $0x108] sm:$0xff]
    %v77 = vld [vmem:[#allocation2 + $0x110] sm:$0xff]
    %v78 = vld [vmem:[#allocation2 + $0x118] sm:$0xff]
    %v79 = vld [vmem:[#allocation2 + $0x120] sm:$0xff]
    %v80 = vld [vmem:[#allocation2 + $0x128] sm:$0xff]
    %v81 = vld [vmem:[#allocation2 + $0x130] sm:$0xff]
    %v82 = vld [vmem:[#allocation2 + $0x138] sm:$0xff]
    %v83 = vld [vmem:[#allocation2 + $0x140] sm:$0xff]
    %v84 = vld [vmem:[#allocation2 + $0x148] sm:$0xff]
    %v85 = vld [vmem:[#allocation2 + $0x150] sm:$0xff]
    %v86 = vld [vmem:[#allocation2 + $0x158] sm:$0xff]
    %v87 = vld [vmem:[#allocation2 + $0x160] sm:$0xff]
    %v88 = vld [vmem:[#allocation2 + $0x168] sm:$0xff]
    %v89 = vld [vmem:[#allocation2 + $0x170] sm:$0xff]
    %v90 = vld [vmem:[#allocation2 + $0x178] sm:$0xff]
    %v91 = vld [vmem:[#allocation2 + $0x180] sm:$0xff]
    %v92 = vld [vmem:[#allocation2 + $0x188] sm:$0xff]
    %v93 = vld [vmem:[#allocation2 + $0x190] sm:$0xff]
    %v94 = vld [vmem:[#allocation2 + $0x198] sm:$0xff]
    %v95 = vld [vmem:[#allocation2 + $0x1a0] sm:$0xff]
    %v96 = vld [vmem:[#allocation2 + $0x1a8] sm:$0xff]
    %v97 = vld [vmem:[#allocation2 + $0x1b0] sm:$0xff]
    %v98 = vld [vmem:[#allocation2 + $0x1b8] sm:$0xff]
    %v99 = vld [vmem:[#allocation2 + $0x1c0] sm:$0xff]
    %v100 = vld [vmem:[#allocation2 + $0x1c8] sm:$0xff]
    %v101 = vld [vmem:[#allocation2 + $0x1d0] sm:$0xff]
    %v102 = vld [vmem:[#allocation2 + $0x1d8] sm:$0xff]
    %v103 = vld [vmem:[#allocation2 + $0x1e0] sm:$0xff]
    %v104 = vld [vmem:[#allocation2 + $0x1e8] sm:$0xff]
    %v105 = vld [vmem:[#allocation2 + $0x1f0] sm:$0xff]
    %v106 = vld [vmem:[#allocation2 + $0x1f8] sm:$0xff]
    %v107 = vld [vmem:[#allocation2 + $0x200] sm:$0xff]
    %v108 = vld [vmem:[#allocation2 + $0x208] sm:$0xff]
    %v109 = vld [vmem:[#allocation2 + $0x210] sm:$0xff]
    %v110 = vld [vmem:[#allocation2 + $0x218] sm:$0xff]
    %v111 = vld [vmem:[#allocation2 + $0x220] sm:$0xff]
    %v112 = vld [vmem:[#allocation2 + $0x228] sm:$0xff]
    %v113 = vld [vmem:[#allocation2 + $0x230] sm:$0xff]
    %v114 = vld [vmem:[#allocation2 + $0x238] sm:$0xff]
    %v115 = vld [vmem:[#allocation2 + $0x240] sm:$0xff]
    %v116 = vld [vmem:[#allocation2 + $0x248] sm:$0xff]
    %v117 = vld [vmem:[#allocation2 + $0x250] sm:$0xff]
    %v118 = vld [vmem:[#allocation2 + $0x258] sm:$0xff]
    %v119 = vld [vmem:[#allocation2 + $0x260] sm:$0xff]
    %v120 = vld [vmem:[#allocation2 + $0x268] sm:$0xff]
    %v121 = vld [vmem:[#allocation2 + $0x270] sm:$0xff]
    %v122 = vld [vmem:[#allocation2 + $0x278] sm:$0xff]
    %v123 = vld [vmem:[#allocation2 + $0x280] sm:$0xff]
    %v124 = vld [vmem:[#allocation2 + $0x288] sm:$0xff]
    %v125 = vld [vmem:[#allocation2 + $0x290] sm:$0xff]
    %v126 = vld [vmem:[#allocation2 + $0x298] sm:$0xff]
    %v127 = vld [vmem:[#allocation2 + $0x2a0] sm:$0xff]
    %v128 = vld [vmem:[#allocation2 + $0x2a8] sm:$0xff]
    %v129 = vld [vmem:[#allocation2 + $0x2b0] sm:$0xff]
    %v130 = vld [vmem:[#allocation2 + $0x2b8] sm:$0xff]
    %v131 = vld [vmem:[#allocation2 + $0x2c0] sm:$0xff]
    %v132 = vld [vmem:[#allocation2 + $0x2c8] sm:$0xff]
    %v133 = vld [vmem:[#allocation2 + $0x2d0] sm:$0xff]
    %v134 = vld [vmem:[#allocation2 + $0x2d8] sm:$0xff]
    %v135 = vld [vmem:[#allocation2 + $0x2e0] sm:$0xff]
    %v136 = vld [vmem:[#allocation2 + $0x2e8] sm:$0xff]
    %v137 = vld [vmem:[#allocation2 + $0x2f0] sm:$0xff]
    %v138 = vld [vmem:[#allocation2 + $0x2f8] sm:$0xff]
    %v139 = vld [vmem:[#allocation2 + $0x300] sm:$0xff]
    %v140 = vld [vmem:[#allocation2 + $0x308] sm:$0xff]
    %v141 = vld [vmem:[%s2] sm:$0x1]
    %v143 = vlaneseq
    %v144 = vshrl.u32 %v143, 7
    %v145 = vsub.s32 0, %v144
    %v146 = vrot.slane %v141, %v145
    %v156 = vcombine.low %v35, %v39
    %v157 = vcombine.high %v35, %v39
    %v158 = vcombine.low %v36, %v40
    %v159 = vcombine.high %v36, %v40
    %v160 = vcombine.low %v37, %v41
    %v161 = vcombine.high %v37, %v41
    %v162 = vcombine.low %v38, %v42
    %vm169 = vcmask 130048
    %v170 = vsel %vm169, %v162, 0
    %172 = vmatprep.subr.mxu0 0.0
    %173 = vmatpush1.msra.mxu0 %v58
    %174 = vmatprep.subr.mxu0 0.0
    %175 = vmatpush1.msra.mxu0 %v57
    %176 = vmatprep.subr.mxu0 0.0
    %177 = vmatpush1.msra.mxu0 %v56
    %178 = vmatprep.subr.mxu0 0.0
    %179 = vmatpush1.msra.mxu0 %v55
    %180 = vmatprep.subr.mxu0 0.0
    %181 = vmatpush1.msra.mxu0 %v54
    %182 = vmatprep.subr.mxu0 0.0
    %183 = vmatpush1.msra.mxu0 %v53
    %184 = vmatprep.subr.mxu0 0.0
    %185 = vmatpush1.msra.mxu0 %v52
    %186 = vmatprep.subr.mxu0 0.0
    %187 = vmatpush1.msra.mxu0 %v51
    %188 = vmatprep.subr.mxu0 0.0
    %189 = vmatpush1.msra.mxu0 %v50
    %190 = vmatprep.subr.mxu0 0.0
    %191 = vmatpush1.msra.mxu0 %v49
    %192 = vmatprep.subr.mxu0 0.0
    %193 = vmatpush1.msra.mxu0 %v48
    %194 = vmatprep.subr.mxu0 0.0
    %195 = vmatpush1.msra.mxu0 %v47
    %196 = vmatprep.subr.mxu0 0.0
    %197 = vmatpush1.msra.mxu0 %v46
    %198 = vmatprep.subr.mxu0 0.0
    %199 = vmatpush1.msra.mxu0 %v45
    %200 = vmatprep.subr.mxu0 0.0
    %201 = vmatpush1.msra.mxu0 %v44
    %202 = vmatprep.subr.mxu0 0.0
    %203 = vmatpush1.msra.mxu0 %v43
    %204 = vmatprep.subr.mxu0 0.0
    %205 = vmatpush2.msra.mxu0 %v74
    %206 = vmatprep.subr.mxu0 0.0
    %207 = vmatpush2.msra.mxu0 %v73
    %208 = vmatprep.subr.mxu0 0.0
    %209 = vmatpush2.msra.mxu0 %v72
    %210 = vmatprep.subr.mxu0 0.0
    %211 = vmatpush2.msra.mxu0 %v71
    %212 = vmatprep.subr.mxu0 0.0
    %213 = vmatpush2.msra.mxu0 %v70
    %214 = vmatprep.subr.mxu0 0.0
    %215 = vmatpush2.msra.mxu0 %v69
    %216 = vmatprep.subr.mxu0 0.0
    %217 = vmatpush2.msra.mxu0 %v68
    %218 = vmatprep.subr.mxu0 0.0
    %219 = vmatpush2.msra.mxu0 %v67
    %220 = vmatprep.subr.mxu0 0.0
    %221 = vmatpush2.msra.mxu0 %v66
    %222 = vmatprep.subr.mxu0 0.0
    %223 = vmatpush2.msra.mxu0 %v65
    %224 = vmatprep.subr.mxu0 0.0
    %225 = vmatpush2.msra.mxu0 %v64
    %226 = vmatprep.subr.mxu0 0.0
    %227 = vmatpush2.msra.mxu0 %v63
    %228 = vmatprep.subr.mxu0 0.0
    %229 = vmatpush2.msra.mxu0 %v62
    %230 = vmatprep.subr.mxu0 0.0
    %231 = vmatpush2.msra.mxu0 %v61
    %232 = vmatprep.subr.mxu0 0.0
    %233 = vmatpush2.msra.mxu0 %v60
    %234 = vmatprep.subr.mxu0 0.0
    %235 = vmatpush2.msra.mxu0 %v59
    %236 = vmatprep.mubr.f32.mxu0 %v157
    %237 = vmatmul.mubr.f32.gmra.mxu0 %v156
    %v238 = vpop.f32.mrf.mxu0
    %v239 = vadd.f32 %v146, %v238
    %v240 = vpop.f32.mrf.mxu0
    %241 = vdwg.mxu0
    %242 = vmatprep.subr.mxu0 0.0
    %243 = vmatpush1.msra.mxu0 %v90
    %244 = vmatprep.subr.mxu0 0.0
    %245 = vmatpush1.msra.mxu0 %v89
    %246 = vmatprep.subr.mxu0 0.0
    %247 = vmatpush1.msra.mxu0 %v88
    %248 = vmatprep.subr.mxu0 0.0
    %249 = vmatpush1.msra.mxu0 %v87
    %250 = vmatprep.subr.mxu0 0.0
    %251 = vmatpush1.msra.mxu0 %v86
    %252 = vmatprep.subr.mxu0 0.0
    %253 = vmatpush1.msra.mxu0 %v85
    %254 = vmatprep.subr.mxu0 0.0
    %255 = vmatpush1.msra.mxu0 %v84
    %256 = vmatprep.subr.mxu0 0.0
    %257 = vmatpush1.msra.mxu0 %v83
    %258 = vmatprep.subr.mxu0 0.0
    %259 = vmatpush1.msra.mxu0 %v82
    %260 = vmatprep.subr.mxu0 0.0
    %261 = vmatpush1.msra.mxu0 %v81
    %262 = vmatprep.subr.mxu0 0.0
    %263 = vmatpush1.msra.mxu0 %v80
    %264 = vmatprep.subr.mxu0 0.0
    %265 = vmatpush1.msra.mxu0 %v79
    %266 = vmatprep.subr.mxu0 0.0
    %267 = vmatpush1.msra.mxu0 %v78
    %268 = vmatprep.subr.mxu0 0.0
    %269 = vmatpush1.msra.mxu0 %v77
    %270 = vmatprep.subr.mxu0 0.0
    %271 = vmatpush1.msra.mxu0 %v76
    %272 = vmatprep.subr.mxu0 0.0
    %273 = vmatpush1.msra.mxu0 %v75
    %274 = vmatprep.subr.mxu0 0.0
    %275 = vmatpush2.msra.mxu0 %v106
    %276 = vmatprep.subr.mxu0 0.0
    %277 = vmatpush2.msra.mxu0 %v105
    %278 = vmatprep.subr.mxu0 0.0
    %279 = vmatpush2.msra.mxu0 %v104
    %280 = vmatprep.subr.mxu0 0.0
    %281 = vmatpush2.msra.mxu0 %v103
    %282 = vmatprep.subr.mxu0 0.0
    %283 = vmatpush2.msra.mxu0 %v102
    %284 = vmatprep.subr.mxu0 0.0
    %285 = vmatpush2.msra.mxu0 %v101
    %286 = vmatprep.subr.mxu0 0.0
    %287 = vmatpush2.msra.mxu0 %v100
    %288 = vmatprep.subr.mxu0 0.0
    %289 = vmatpush2.msra.mxu0 %v99
    %290 = vmatprep.subr.mxu0 0.0
    %291 = vmatpush2.msra.mxu0 %v98
    %292 = vmatprep.subr.mxu0 0.0
    %293 = vmatpush2.msra.mxu0 %v97
    %294 = vmatprep.subr.mxu0 0.0
    %295 = vmatpush2.msra.mxu0 %v96
    %296 = vmatprep.subr.mxu0 0.0
    %297 = vmatpush2.msra.mxu0 %v95
    %298 = vmatprep.subr.mxu0 0.0
    %299 = vmatpush2.msra.mxu0 %v94
    %300 = vmatprep.subr.mxu0 0.0
    %301 = vmatpush2.msra.mxu0 %v93
    %302 = vmatprep.subr.mxu0 0.0
    %303 = vmatpush2.msra.mxu0 %v92
    %304 = vmatprep.subr.mxu0 0.0
    %305 = vmatpush2.msra.mxu0 %v91
    %306 = vmatprep.mubr.f32.mxu0 %v159
    %307 = vmatmul.mubr.f32.gmra.mxu0 %v158
    %v308 = vpop.f32.mrf.mxu0
    %v309 = vadd.f32 %v239, %v308
    %v310 = vpop.f32.mrf.mxu0
    %311 = vdwg.mxu0
    %312 = vmatprep.subr.mxu0 0.0
    %313 = vmatpush1.msra.mxu0 %v122
    %314 = vmatprep.subr.mxu0 0.0
    %315 = vmatpush1.msra.mxu0 %v121
    %316 = vmatprep.subr.mxu0 0.0
    %317 = vmatpush1.msra.mxu0 %v120
    %318 = vmatprep.subr.mxu0 0.0
    %319 = vmatpush1.msra.mxu0 %v119
    %320 = vmatprep.subr.mxu0 0.0
    %321 = vmatpush1.msra.mxu0 %v118
    %322 = vmatprep.subr.mxu0 0.0
    %323 = vmatpush1.msra.mxu0 %v117
    %324 = vmatprep.subr.mxu0 0.0
    %325 = vmatpush1.msra.mxu0 %v116
    %326 = vmatprep.subr.mxu0 0.0
    %327 = vmatpush1.msra.mxu0 %v115
    %328 = vmatprep.subr.mxu0 0.0
    %329 = vmatpush1.msra.mxu0 %v114
    %330 = vmatprep.subr.mxu0 0.0
    %331 = vmatpush1.msra.mxu0 %v113
    %332 = vmatprep.subr.mxu0 0.0
    %333 = vmatpush1.msra.mxu0 %v112
    %334 = vmatprep.subr.mxu0 0.0
    %335 = vmatpush1.msra.mxu0 %v111
    %336 = vmatprep.subr.mxu0 0.0
    %337 = vmatpush1.msra.mxu0 %v110
    %338 = vmatprep.subr.mxu0 0.0
    %339 = vmatpush1.msra.mxu0 %v109
    %340 = vmatprep.subr.mxu0 0.0
    %341 = vmatpush1.msra.mxu0 %v108
    %342 = vmatprep.subr.mxu0 0.0
    %343 = vmatpush1.msra.mxu0 %v107
    %344 = vmatprep.subr.mxu0 0.0
    %345 = vmatpush2.msra.mxu0 %v138
    %346 = vmatprep.subr.mxu0 0.0
    %347 = vmatpush2.msra.mxu0 %v137
    %348 = vmatprep.subr.mxu0 0.0
    %349 = vmatpush2.msra.mxu0 %v136
    %350 = vmatprep.subr.mxu0 0.0
    %351 = vmatpush2.msra.mxu0 %v135
    %352 = vmatprep.subr.mxu0 0.0
    %353 = vmatpush2.msra.mxu0 %v134
    %354 = vmatprep.subr.mxu0 0.0
    %355 = vmatpush2.msra.mxu0 %v133
    %356 = vmatprep.subr.mxu0 0.0
    %357 = vmatpush2.msra.mxu0 %v132
    %358 = vmatprep.subr.mxu0 0.0
    %359 = vmatpush2.msra.mxu0 %v131
    %360 = vmatprep.subr.mxu0 0.0
    %361 = vmatpush2.msra.mxu0 %v130
    %362 = vmatprep.subr.mxu0 0.0
    %363 = vmatpush2.msra.mxu0 %v129
    %364 = vmatprep.subr.mxu0 0.0
    %365 = vmatpush2.msra.mxu0 %v128
    %366 = vmatprep.subr.mxu0 0.0
    %367 = vmatpush2.msra.mxu0 %v127
    %368 = vmatprep.subr.mxu0 0.0
    %369 = vmatpush2.msra.mxu0 %v126
    %370 = vmatprep.subr.mxu0 0.0
    %371 = vmatpush2.msra.mxu0 %v125
    %372 = vmatprep.subr.mxu0 0.0
    %373 = vmatpush2.msra.mxu0 %v124
    %374 = vmatprep.subr.mxu0 0.0
    %375 = vmatpush2.msra.mxu0 %v123
    %376 = vmatprep.mubr.f32.mxu0 %v161
    %377 = vmatmul.mubr.f32.gmra.mxu0 %v160
    %v378 = vpop.f32.mrf.mxu0
    %v379 = vadd.f32 %v309, %v378
    %v380 = vpop.f32.mrf.mxu0
    %381 = vdwg.mxu0
    %382 = vmatprep.subr.mxu0 0.0
    %383 = vmatpush1.msra.mxu0 0.0
    %384 = vmatprep.subr.mxu0 0.0
    %385 = vmatpush1.msra.mxu0 0.0
    %386 = vmatprep.subr.mxu0 0.0
    %387 = vmatpush1.msra.mxu0 0.0
    %388 = vmatprep.subr.mxu0 0.0
    %389 = vmatpush1.msra.mxu0 0.0
    %390 = vmatprep.subr.mxu0 0.0
    %391 = vmatpush1.msra.mxu0 0.0
    %392 = vmatprep.subr.mxu0 0.0
    %393 = vmatpush1.msra.mxu0 0.0
    %394 = vmatprep.subr.mxu0 0.0
    %395 = vmatpush1.msra.mxu0 0.0
    %396 = vmatprep.subr.mxu0 0.0
    %397 = vmatpush1.msra.mxu0 0.0
    %398 = vmatprep.subr.mxu0 0.0
    %399 = vmatpush1.msra.mxu0 0.0
    %400 = vmatprep.subr.mxu0 0.0
    %401 = vmatpush1.msra.mxu0 0.0
    %402 = vmatprep.subr.mxu0 0.0
    %403 = vmatpush1.msra.mxu0 0.0
    %404 = vmatprep.subr.mxu0 0.0
    %405 = vmatpush1.msra.mxu0 0.0
    %406 = vmatprep.subr.mxu0 0.0
    %407 = vmatpush1.msra.mxu0 0.0
    %408 = vmatprep.subr.mxu0 0.0
    %409 = vmatpush1.msra.mxu0 0.0
    %410 = vmatprep.subr.mxu0 0.0
    %411 = vmatpush1.msra.mxu0 %v140
    %412 = vmatprep.subr.mxu0 0.0
    %413 = vmatpush1.msra.mxu0 %v139
    %414 = vmatprep.subr.mxu0 0.0
    %415 = vmatpush2.msra.mxu0 0.0
    %416 = vmatprep.subr.mxu0 0.0
    %417 = vmatpush2.msra.mxu0 0.0
    %418 = vmatprep.subr.mxu0 0.0
    %419 = vmatpush2.msra.mxu0 0.0
    %420 = vmatprep.subr.mxu0 0.0
    %421 = vmatpush2.msra.mxu0 0.0
    %422 = vmatprep.subr.mxu0 0.0
    %423 = vmatpush2.msra.mxu0 0.0
    %424 = vmatprep.subr.mxu0 0.0
    %425 = vmatpush2.msra.mxu0 0.0
    %426 = vmatprep.subr.mxu0 0.0
    %427 = vmatpush2.msra.mxu0 0.0
    %428 = vmatprep.subr.mxu0 0.0
    %429 = vmatpush2.msra.mxu0 0.0
    %430 = vmatprep.subr.mxu0 0.0
    %431 = vmatpush2.msra.mxu0 0.0
    %432 = vmatprep.subr.mxu0 0.0
    %433 = vmatpush2.msra.mxu0 0.0
    %434 = vmatprep.subr.mxu0 0.0
    %435 = vmatpush2.msra.mxu0 0.0
    %436 = vmatprep.subr.mxu0 0.0
    %437 = vmatpush2.msra.mxu0 0.0
    %438 = vmatprep.subr.mxu0 0.0
    %439 = vmatpush2.msra.mxu0 0.0
    %440 = vmatprep.subr.mxu0 0.0
    %441 = vmatpush2.msra.mxu0 0.0
    %442 = vmatprep.subr.mxu0 0.0
    %443 = vmatpush2.msra.mxu0 0.0
    %444 = vmatprep.subr.mxu0 0.0
    %445 = vmatpush2.msra.mxu0 0.0
    %446 = vmatprep.mubr.f32.mxu0 0.0
    %447 = vmatmul.mubr.f32.gmra.mxu0 %v170
    %v448 = vpop.f32.mrf.mxu0
    %v449 = vadd.f32 %v379, %v448
    %v450 = vpop.f32.mrf.mxu0
    %451 = vdwg.mxu0
    %v452 = vmax.f32 %v449, 0.0
    %v453 = vld [vmem:[%s3] sm:$0xff]
    %v454 = vld [vmem:[%s3 + $0x8] sm:$0xff]
    %v455 = vld [vmem:[%s3 + $0x10] sm:$0xff]
    %v456 = vld [vmem:[%s3 + $0x18] sm:$0xff]
    %v457 = vld [vmem:[%s3 + $0x20] sm:$0xff]
    %v458 = vld [vmem:[%s3 + $0x28] sm:$0xff]
    %v459 = vld [vmem:[%s3 + $0x30] sm:$0xff]
    %v460 = vld [vmem:[%s3 + $0x38] sm:$0xff]
    %v461 = vld [vmem:[%s3 + $0x40] sm:$0xff]
    %v462 = vld [vmem:[%s3 + $0x48] sm:$0xff]
    %v463 = vld [vmem:[%s3 + $0x50] sm:$0xff]
    %v464 = vld [vmem:[%s3 + $0x58] sm:$0xff]
    %v465 = vld [vmem:[%s3 + $0x60] sm:$0xff]
    %v466 = vld [vmem:[%s3 + $0x68] sm:$0xff]
    %v467 = vld [vmem:[%s3 + $0x70] sm:$0xff]
    %v468 = vld [vmem:[%s3 + $0x78] sm:$0xff]
    %v469 = vld [vmem:[%s4] sm:$0x1]
    %v471 = vlaneseq
    %v472 = vshrl.u32 %v471, 7
    %v473 = vsub.s32 0, %v472
    %v474 = vrot.slane %v469, %v473
    %476 = vmatprep.subr.mxu0 0.0
    %477 = vmatpush1.msra.mxu0 %v468
    %478 = vmatprep.subr.mxu0 0.0
    %479 = vmatpush1.msra.mxu0 %v467
    %480 = vmatprep.subr.mxu0 0.0
    %481 = vmatpush1.msra.mxu0 %v466
    %482 = vmatprep.subr.mxu0 0.0
    %483 = vmatpush1.msra.mxu0 %v465
    %484 = vmatprep.subr.mxu0 0.0
    %485 = vmatpush1.msra.mxu0 %v464
    %486 = vmatprep.subr.mxu0 0.0
    %487 = vmatpush1.msra.mxu0 %v463
    %488 = vmatprep.subr.mxu0 0.0
    %489 = vmatpush1.msra.mxu0 %v462
    %490 = vmatprep.subr.mxu0 0.0
    %491 = vmatpush1.msra.mxu0 %v461
    %492 = vmatprep.subr.mxu0 0.0
    %493 = vmatpush1.msra.mxu0 %v460
    %494 = vmatprep.subr.mxu0 0.0
    %495 = vmatpush1.msra.mxu0 %v459
    %496 = vmatprep.subr.mxu0 0.0
    %497 = vmatpush1.msra.mxu0 %v458
    %498 = vmatprep.subr.mxu0 0.0
    %499 = vmatpush1.msra.mxu0 %v457
    %500 = vmatprep.subr.mxu0 0.0
    %501 = vmatpush1.msra.mxu0 %v456
    %502 = vmatprep.subr.mxu0 0.0
    %503 = vmatpush1.msra.mxu0 %v455
    %504 = vmatprep.subr.mxu0 0.0
    %505 = vmatpush1.msra.mxu0 %v454
    %506 = vmatprep.subr.mxu0 0.0
    %507 = vmatpush1.msra.mxu0 %v453
    %508 = vmatprep.subr.mxu0 0.0
    %509 = vmatpush2.msra.mxu0 0.0
    %510 = vmatprep.subr.mxu0 0.0
    %511 = vmatpush2.msra.mxu0 0.0
    %512 = vmatprep.subr.mxu0 0.0
    %513 = vmatpush2.msra.mxu0 0.0
    %514 = vmatprep.subr.mxu0 0.0
    %515 = vmatpush2.msra.mxu0 0.0
    %516 = vmatprep.subr.mxu0 0.0
    %517 = vmatpush2.msra.mxu0 0.0
    %518 = vmatprep.subr.mxu0 0.0
    %519 = vmatpush2.msra.mxu0 0.0
    %520 = vmatprep.subr.mxu0 0.0
    %521 = vmatpush2.msra.mxu0 0.0
    %522 = vmatprep.subr.mxu0 0.0
    %523 = vmatpush2.msra.mxu0 0.0
    %524 = vmatprep.subr.mxu0 0.0
    %525 = vmatpush2.msra.mxu0 0.0
    %526 = vmatprep.subr.mxu0 0.0
    %527 = vmatpush2.msra.mxu0 0.0
    %528 = vmatprep.subr.mxu0 0.0
    %529 = vmatpush2.msra.mxu0 0.0
    %530 = vmatprep.subr.mxu0 0.0
    %531 = vmatpush2.msra.mxu0 0.0
    %532 = vmatprep.subr.mxu0 0.0
    %533 = vmatpush2.msra.mxu0 0.0
    %534 = vmatprep.subr.mxu0 0.0
    %535 = vmatpush2.msra.mxu0 0.0
    %536 = vmatprep.subr.mxu0 0.0
    %537 = vmatpush2.msra.mxu0 0.0
    %538 = vmatprep.subr.mxu0 0.0
    %539 = vmatpush2.msra.mxu0 0.0
    %540 = vmatprep.mubr.f32.mxu0 0.0
    %541 = vmatmul.mubr.f32.gmra.mxu0 %v452
    %v542 = vpop.f32.mrf.mxu0
    %v543 = vadd.f32 %v474, %v542
    %v544 = vpop.f32.mrf.mxu0
    %545 = vdwg.mxu0
    %vm546 = vcmask 506880
    %547 = vst.msk [vmem:[#allocation5] sm:$0xff] %vm546, %v543
    // Predicated region
    $region26: #{model_forward.1} parent=1 // pred_check
      _
    $region27: #{model_forward.1} parent=1 // pred_check_branch
      %549 = sbr.rel (0) target = $region29
    $region28: #{model_forward.1} parent=1 // pred_region
      %s551 = ssub.s32 128, 64
      %552 = vsyncadd [#allocation4], %s551
      %s553 = sshll.u32 [#allocation5], 4
      %s554 = int_to_ptr.vmem [resolvable:$true] %s553
      %559 = dma.vmem_to_hbm [thread:$0]  %s554, 64, %s5, [#allocation4], 64, 64, 4
    $region29: #{model_forward.1} parent=1 // pred_fallthru
      _
    // Predicated region
    $region30: #{model_forward.1} parent=1 // pred_check
      _
    $region31: #{model_forward.1} parent=1 // pred_check_branch
      %561 = sbr.rel (0) target = $region33
    $region32: #{model_forward.1} parent=1 // pred_region
      %562 = dma.done [#allocation4], 128
    $region33: #{model_forward.1} parent=1 // pred_fallthru
      _
    %563 = vsyncpa [#allocation3], 1
    %564 = vsyncpa [#allocation4], 1

</llo_original>
